<compile_context>
chip_gen: v6e
topology: v6e:2x2x1
jax: 0.10.0
libtpu: 0.0.40
codegen_flags: <defaults>
</compile_context>

<pallas_src>
import functools

import jax
import jax.numpy as jnp
from jax.experimental import pallas as pl
from jax.experimental.pallas import tpu as pltpu

_LANES = 128


def _round_up(x, m):
    return (x + m - 1) // m * m


def _make_kernel(L_out_pad, C_out, aligned):
    """Kernel body with static shapes closed over."""
    N = L_out_pad * C_out

    def _tree_max(parts):
        while len(parts) > 1:
            nxt = [jnp.maximum(parts[i], parts[i + 1])
                   for i in range(0, len(parts) - 1, 2)]
            if len(parts) % 2:
                nxt.append(parts[-1])
            parts = nxt
        return parts[0]

    def kernel(x_ref, w_ref, b_ref, o_ref):
        # x_ref: (TB, F)   F = C_in * L            flattened NCL input tile
        # w_ref: (F, N)    N = L_out_pad * C_out   banded conv weight (resident)
        # b_ref: (1, C_out)
        # o_ref: (TB, C_out)
        acc = jnp.dot(x_ref[...], w_ref[...],
                      preferred_element_type=jnp.float32)        # (TB, N) f32

        if aligned:
            # (a) max over 128-lane groups: clean full-vreg VPU maxima.
            groups = N // _LANES
            m = _tree_max([acc[:, g * _LANES:(g + 1) * _LANES]
                           for g in range(groups)])              # (TB, 128)
            # (b) finish inside the surviving vreg on the XLU (idle slot):
            #     lane rolls by 64, 32, ... down to C_out + max each time.
            shift = _LANES // 2
            while shift >= C_out:
                m = jnp.maximum(m, pltpu.roll(m, shift=shift, axis=1))
                shift //= 2
            m = m[:, :C_out]                                     # (TB, C_out)
        else:
            # Generic fallback: tree-reduce the C_out-wide time slices.
            m = _tree_max([acc[:, l * C_out:(l + 1) * C_out]
                           for l in range(L_out_pad)])

        # bias + ReLU hoisted past the max (bias const over time, ReLU monotone).
        o_ref[...] = jnp.maximum(m + b_ref[...], 0.0).astype(o_ref.dtype)

    return kernel


def _banded_weight(weight, L, L_out, L_out_pad, padding):
    """(C_out, C_in, K) conv weight -> (C_in*L, L_out_pad*C_out) banded weight.

    W[c*L + t, l*C_out + o] = weight[o, c, t - l + padding] if 0 <= t-l+pad < K
                              0                             otherwise
    The conv's zero padding is absorbed into the band structure, so the kernel
    input needs no padding or transpose at all.  Columns l >= L_out (lane-pad)
    DUPLICATE the valid l=0 column -> no-op under the max-over-time.  (A zero
    column would be incorrect: it would inject 0 into the pre-bias max.)
    """
    C_out, C_in, K = weight.shape
    t = jnp.arange(L)
    l_col = jnp.arange(L_out_pad)
    l_eff = jnp.where(l_col < L_out, l_col, 0)              # pad cols -> copy of l=0
    k_idx = t[:, None] - l_eff[None, :] + padding           # (L, L_out_pad)
    valid = (k_idx >= 0) & (k_idx < K)
    k_safe = jnp.clip(k_idx, 0, K - 1)
    w_t = jnp.transpose(weight, (2, 1, 0))                  # (K, C_in, C_out)
    w4 = jnp.where(valid[:, :, None, None], w_t[k_safe], 0.0)   # (L, Lp, C_in, C_out)
    return jnp.transpose(w4, (2, 0, 1, 3)).reshape(C_in * L, L_out_pad * C_out)


@functools.partial(jax.jit, static_argnames=("kernel_size", "padding"))
def cnn_forward(x_ncl, weight, bias, *, kernel_size=5, padding=1):
    """
    x_ncl  : (B, C_in, L)       -- same layout as the PyTorch module input.
                                   Pass bf16 activations (any generation:
                                   v5e/v6e/v7x) to halve the dominant x DMA
                                   bytes; accumulation is always f32.
    weight : (C_out, C_in, K)   -- PyTorch Conv1d weight layout
    bias   : (C_out,)
    returns: (B, C_out)
    """
    B, C_in, L = x_ncl.shape
    C_out, _, K = weight.shape
    assert K == kernel_size
    L_out = L + 2 * padding - K + 1
    assert L_out >= 1

    aligned = (C_out <= _LANES) and (_LANES % C_out == 0)
    L_out_pad = _round_up(L_out, _LANES // C_out) if aligned else L_out
    F = C_in * L
    N = L_out_pad * C_out

    # Small banded weight built once; x gets only a zero-copy reshape.
    w_band = _banded_weight(weight.astype(jnp.float32), L, L_out, L_out_pad,
                            padding)
    x_flat = x_ncl.reshape(B, F)
    b2 = bias.reshape(1, C_out).astype(jnp.float32)

    # Follow the input dtype: bf16 only pays off if the narrow activations
    # already exist in HBM (no standalone wrapper-side cast of x).
    if x_flat.dtype == jnp.bfloat16:
        w_band = w_band.astype(jnp.bfloat16)

    # Batch tile: big enough to amortize ~0.35us/grid-step pipeline overhead,
    # rounded to the sublane pack (16 rows for 16-bit, 8 for f32), and chosen
    # so the "parallel" grid keeps >=2 steps when B allows (v7x: 2 TCs).
    pack = 16 if x_flat.dtype.itemsize == 2 else 8
    TB_CAP = 1024
    if B <= 2 * pack:
        TB = _round_up(B, pack)
    else:
        n_steps = max(2, pl.cdiv(B, TB_CAP))
        TB = min(TB_CAP, _round_up(pl.cdiv(B, n_steps), pack))
    grid = (pl.cdiv(B, TB),)   # ragged last block: Pallas masks the OOB writes

    # TODO(synk): at production char-CNN sizes, single-buffer the resident
    # weight (pipeline_mode) / keep it bf16 so it fits v7x's 64 MiB VMEM.
    out = pl.pallas_call(
        _make_kernel(L_out_pad, C_out, aligned),
        out_shape=jax.ShapeDtypeStruct((B, C_out), x_ncl.dtype),
        grid=grid,
        in_specs=[
            pl.BlockSpec((TB, F), lambda i: (i, 0)),
            pl.BlockSpec((F, N), lambda i: (0, 0)),      # resident across grid
            pl.BlockSpec((1, C_out), lambda i: (0, 0)),  # resident across grid
        ],
        out_specs=pl.BlockSpec((TB, C_out), lambda i: (i, 0)),
        compiler_params=pltpu.CompilerParams(
            dimension_semantics=("parallel",),
            vmem_limit_bytes=32 * 1024 * 1024,  # tiny tiles; safe on v5e/v6e/v7x
        ),
    )(x_flat, w_band, b2)
    return out


def _reference_forward(x_ncl, weight, bias, kernel_size=5, padding=1):
    """Pure-JAX reference reproducing torch Conv1d -> ReLU -> max(dim=2)."""
    B, C_in, L = x_ncl.shape
    C_out, _, K = weight.shape
    x_pad = jnp.pad(x_ncl, ((0, 0), (0, 0), (padding, padding)))
    L_out = L + 2 * padding - K + 1
    conv = jnp.zeros((B, C_out, L_out), jnp.float32)
    for k in range(K):
        conv = conv + jnp.einsum("bcl,oc->bol",
                                 x_pad[:, :, k:k + L_out], weight[:, :, k])
    conv = conv + bias[None, :, None]
    conv = jnp.maximum(conv, 0.0)
    return jnp.max(conv, axis=2)


if __name__ == "__main__":
    # Small shapes consistent with the module's forward:
    #   batch=2, char_emb_size=4, word_emb_size=32, max_len=16
    B, C_IN, C_OUT, MAX_LEN, K, PAD = 2, 4, 32, 16, 5, 1

    key = jax.random.PRNGKey(0)
    kx, kw, kb = jax.random.split(key, 3)
    x = jax.random.normal(kx, (B, C_IN, MAX_LEN), dtype=jnp.float32)
    weight = 0.1 * jax.random.normal(kw, (C_OUT, C_IN, K), dtype=jnp.float32)
    bias = 0.1 * jax.random.normal(kb, (C_OUT,), dtype=jnp.float32)

    ref = _reference_forward(x, weight, bias, kernel_size=K, padding=PAD)

    # f32 path (exact check)
    out = cnn_forward(x, weight, bias, kernel_size=K, padding=PAD)
    out = jax.block_until_ready(out)
    assert out.shape == (B, C_OUT), out.shape
    assert jnp.allclose(out, ref, atol=1e-5, rtol=1e-5), "f32 mismatch vs reference"

    # bf16-activation path (producer already supplies bf16 -> halved x DMA
    # bytes on every generation; f32 MXU accumulation inside the kernel).
    x_bf16 = x.astype(jnp.bfloat16)
    out_bf16 = cnn_forward(x_bf16, weight, bias, kernel_size=K, padding=PAD)
    out_bf16 = jax.block_until_ready(out_bf16)
    assert out_bf16.shape == (B, C_OUT), out_bf16.shape
    assert jnp.allclose(out_bf16.astype(jnp.float32), ref,
                        atol=5e-2, rtol=5e-2), "bf16 mismatch vs reference"

    print("KERNEL_OK")
</pallas_src>

<mosaic_0001>
module attributes {stable_mosaic.version = 11 : i64} {
  func.func @kernel(%arg0: i32, %arg1: memref<8x64xf32, #tpu.memory_space<vmem>>, %arg2: memref<64x512xf32, #tpu.memory_space<vmem>>, %arg3: memref<1x32xf32, #tpu.memory_space<vmem>>, %arg4: memref<8x32xf32, #tpu.memory_space<vmem>>) attributes {dimension_semantics = [#tpu.dimension_semantics<parallel>], iteration_bounds = array<i64: 1>, scalar_prefetch = 0 : i64, scratch_operands = 0 : i64, tpu.core_type = #tpu.core_type<tc>, window_params = [{transform_indices = @transform_0, window_bounds = array<i64: 8, 64>}, {pipeline_mode = #tpu.pipeline_mode<synchronous>, transform_indices = @transform_1, window_bounds = array<i64: 64, 512>}, {pipeline_mode = #tpu.pipeline_mode<synchronous>, transform_indices = @transform_2, window_bounds = array<i64: 1, 32>}, {transform_indices = @transform_3, window_bounds = array<i64: 8, 32>}]} {
    %c0 = arith.constant 0 : index
    %c0_0 = arith.constant 0 : index
    %0 = vector.load %arg1[%c0, %c0_0] : memref<8x64xf32, #tpu.memory_space<vmem>>, vector<8x64xf32>
    %c0_1 = arith.constant 0 : index
    %c0_2 = arith.constant 0 : index
    %1 = vector.load %arg2[%c0_1, %c0_2] : memref<64x512xf32, #tpu.memory_space<vmem>>, vector<64x512xf32>
    %cst = arith.constant dense<0.000000e+00> : vector<8x512xf32>
    %2 = tpu.matmul %0, %1, %cst {dimension_numbers = #tpu.dot_dimension_numbers<[1], [0], [0], [1], [0, 0, 1, 1], [], []>} : vector<8x64xf32>, vector<64x512xf32>, vector<8x512xf32> -> vector<8x512xf32>
    %3 = vector.extract_strided_slice %2 {offsets = [0, 0], sizes = [8, 128], strides = [1, 1]} : vector<8x512xf32> to vector<8x128xf32>
    %4 = vector.extract_strided_slice %2 {offsets = [0, 128], sizes = [8, 128], strides = [1, 1]} : vector<8x512xf32> to vector<8x128xf32>
    %5 = vector.extract_strided_slice %2 {offsets = [0, 256], sizes = [8, 128], strides = [1, 1]} : vector<8x512xf32> to vector<8x128xf32>
    %6 = vector.extract_strided_slice %2 {offsets = [0, 384], sizes = [8, 128], strides = [1, 1]} : vector<8x512xf32> to vector<8x128xf32>
    %7 = arith.maximumf %3, %4 : vector<8x128xf32>
    %8 = arith.maximumf %5, %6 : vector<8x128xf32>
    %9 = arith.maximumf %7, %8 : vector<8x128xf32>
    %c64_i32 = arith.constant 64 : i32
    %10 = tpu.dynamic_rotate %9 by %c64_i32 dim 1 : vector<8x128xf32>, i32 -> vector<8x128xf32>
    %11 = arith.maximumf %9, %10 : vector<8x128xf32>
    %c32_i32 = arith.constant 32 : i32
    %12 = tpu.dynamic_rotate %11 by %c32_i32 dim 1 : vector<8x128xf32>, i32 -> vector<8x128xf32>
    %13 = arith.maximumf %11, %12 : vector<8x128xf32>
    %14 = vector.extract_strided_slice %13 {offsets = [0, 0], sizes = [8, 32], strides = [1, 1]} : vector<8x128xf32> to vector<8x32xf32>
    %c0_3 = arith.constant 0 : index
    %c0_4 = arith.constant 0 : index
    %15 = vector.load %arg3[%c0_3, %c0_4] : memref<1x32xf32, #tpu.memory_space<vmem>>, vector<1x32xf32>
    %16 = vector.broadcast %15 : vector<1x32xf32> to vector<8x32xf32>
    %17 = arith.addf %14, %16 : vector<8x32xf32>
    %cst_5 = arith.constant 0.000000e+00 : f32
    %18 = vector.broadcast %cst_5 : f32 to vector<8x32xf32>
    %19 = arith.maximumf %17, %18 : vector<8x32xf32>
    %c0_6 = arith.constant 0 : index
    %c0_7 = arith.constant 0 : index
    %20 = vector.load %arg4[%c0_6, %c0_7] : memref<8x32xf32, #tpu.memory_space<vmem>>, vector<8x32xf32>
    tpu.vector_store %arg4[%c0_6, %c0_7], %19 {strides = array<i32>} : memref<8x32xf32, #tpu.memory_space<vmem>>, vector<8x32xf32>,
    return
  }
  func.func @transform_0(%arg0: i32) -> (i32, i32) {
    %c0_i32 = arith.constant 0 : i32
    %c0_i32_0 = arith.constant 0 : i32
    return %arg0, %c0_i32 : i32, i32
  }
  func.func @transform_1(%arg0: i32) -> (i32, i32) {
    %c0_i32 = arith.constant 0 : i32
    %c0_i32_0 = arith.constant 0 : i32
    %c0_i32_1 = arith.constant 0 : i32
    return %c0_i32, %c0_i32_0 : i32, i32
  }
  func.func @transform_2(%arg0: i32) -> (i32, i32) {
    %c0_i32 = arith.constant 0 : i32
    %c0_i32_0 = arith.constant 0 : i32
    %c0_i32_1 = arith.constant 0 : i32
    return %c0_i32, %c0_i32_0 : i32, i32
  }
  func.func @transform_3(%arg0: i32) -> (i32, i32) {
    %c0_i32 = arith.constant 0 : i32
    %c0_i32_0 = arith.constant 0 : i32
    return %arg0, %c0_i32 : i32, i32
  }
}

</mosaic_0001>

<llo_original>
// kernel: cnn_forward.1
$region0: #{cnn_forward.1}
  #allocation0 [shape = 'u32[]', space=smem, size = 0x4, offset = 0x4, fixed_abs, tag = 'smem constant byte address 0x4 - core index']
  #allocation1 [shape = 'u32[144,128]{1,0:T(1,128)}', space=vmem, size = 0x12000, scoped, tag = 'internal scratch']
  %s0 = inlined_call_operand.vmem [shape: f32[2,64], index: 0, kind: input, shape index: {}]
  %s1 = inlined_call_operand.vmem [shape: f32[64,512], index: 1, kind: input, shape index: {}]
  %s2 = inlined_call_operand.vmem [shape: f32[1,32], index: 2, kind: input, shape index: {}]
  %s3 = inlined_call_operand.hbm [shape: f32[2,32], index: 3, kind: output, shape index: {}]
  %s4 = sld [smem:[#allocation0]]
  $region22: #{cnn_forward.1} parent=0
    _
  %s6 = ssub.s32 1, %s4
  %s7 = scalar_select 0, %s6, %s4
  $region1: #{cnn_forward.1} parent=0
    #allocation2 [shape = 'u8[4096]{0}', space=vmem, size = 0x1000, scoped, tag = 'output window, operand 0, single buffered']
    #allocation3 [shape = 's32[1]{0}', space=sflag, size = 0x4, scoped, tag = 'scoped memory for cnn_forward.1']
    %8 = vsyncpa [#allocation3], 0
    // Predicated region
    $region2: #{cnn_forward.1} parent=1 // pred_check
      _
    $region3: #{cnn_forward.1} parent=1 // pred_check_branch
      %10 = sbr.rel (0) target = $region5
    $region4: #{cnn_forward.1} parent=1 // pred_region
      _
    $region5: #{cnn_forward.1} parent=1 // pred_fallthru
      _
    // Predicated region
    $region6: #{cnn_forward.1} parent=1 // pred_check
      _
    $region7: #{cnn_forward.1} parent=1 // pred_check_branch
      %12 = sbr.rel (0) target = $region9
    $region8: #{cnn_forward.1} parent=1 // pred_region
      _
    $region9: #{cnn_forward.1} parent=1 // pred_fallthru
      _
    // Predicated region
    $region10: #{cnn_forward.1} parent=1 // pred_check
      _
    $region11: #{cnn_forward.1} parent=1 // pred_check_branch
      %14 = sbr.rel (0) target = $region13
    $region12: #{cnn_forward.1} parent=1 // pred_region
      _
    $region13: #{cnn_forward.1} parent=1 // pred_fallthru
      _
    %v15 = vld [vmem:[%s0] sm:$0xff]
    %v16 = vld [vmem:[%s1] sm:$0xff]
    %v17 = vld [vmem:[%s1 + $0x8] sm:$0xff]
    %v18 = vld [vmem:[%s1 + $0x10] sm:$0xff]
    %v19 = vld [vmem:[%s1 + $0x18] sm:$0xff]
    %v20 = vld [vmem:[%s1 + $0x20] sm:$0xff]
    %v21 = vld [vmem:[%s1 + $0x28] sm:$0xff]
    %v22 = vld [vmem:[%s1 + $0x30] sm:$0xff]
    %v23 = vld [vmem:[%s1 + $0x38] sm:$0xff]
    %v24 = vld [vmem:[%s1 + $0x40] sm:$0xff]
    %v25 = vld [vmem:[%s1 + $0x48] sm:$0xff]
    %v26 = vld [vmem:[%s1 + $0x50] sm:$0xff]
    %v27 = vld [vmem:[%s1 + $0x58] sm:$0xff]
    %v28 = vld [vmem:[%s1 + $0x60] sm:$0xff]
    %v29 = vld [vmem:[%s1 + $0x68] sm:$0xff]
    %v30 = vld [vmem:[%s1 + $0x70] sm:$0xff]
    %v31 = vld [vmem:[%s1 + $0x78] sm:$0xff]
    %v32 = vld [vmem:[%s1 + $0x80] sm:$0xff]
    %v33 = vld [vmem:[%s1 + $0x88] sm:$0xff]
    %v34 = vld [vmem:[%s1 + $0x90] sm:$0xff]
    %v35 = vld [vmem:[%s1 + $0x98] sm:$0xff]
    %v36 = vld [vmem:[%s1 + $0xa0] sm:$0xff]
    %v37 = vld [vmem:[%s1 + $0xa8] sm:$0xff]
    %v38 = vld [vmem:[%s1 + $0xb0] sm:$0xff]
    %v39 = vld [vmem:[%s1 + $0xb8] sm:$0xff]
    %v40 = vld [vmem:[%s1 + $0xc0] sm:$0xff]
    %v41 = vld [vmem:[%s1 + $0xc8] sm:$0xff]
    %v42 = vld [vmem:[%s1 + $0xd0] sm:$0xff]
    %v43 = vld [vmem:[%s1 + $0xd8] sm:$0xff]
    %v44 = vld [vmem:[%s1 + $0xe0] sm:$0xff]
    %v45 = vld [vmem:[%s1 + $0xe8] sm:$0xff]
    %v46 = vld [vmem:[%s1 + $0xf0] sm:$0xff]
    %v47 = vld [vmem:[%s1 + $0xf8] sm:$0xff]
    %vm48 = vcmask 523264
    %v50 = vsel %vm48, %v15, 0
    %52 = vmatprep.subr.mxu0 0.0
    %53 = vmatpush1.msra.mxu0 0.0
    %54 = vmatprep.subr.mxu0 0.0
    %55 = vmatpush1.msra.mxu0 0.0
    %56 = vmatprep.subr.mxu0 0.0
    %57 = vmatpush1.msra.mxu0 0.0
    %58 = vmatprep.subr.mxu0 0.0
    %59 = vmatpush1.msra.mxu0 0.0
    %60 = vmatprep.subr.mxu0 0.0
    %61 = vmatpush1.msra.mxu0 0.0
    %62 = vmatprep.subr.mxu0 0.0
    %63 = vmatpush1.msra.mxu0 0.0
    %64 = vmatprep.subr.mxu0 0.0
    %65 = vmatpush1.msra.mxu0 0.0
    %66 = vmatprep.subr.mxu0 0.0
    %67 = vmatpush1.msra.mxu0 0.0
    %68 = vmatprep.subr.mxu0 %v45
    %69 = vmatpush1.msra.mxu0 %v44
    %70 = vmatprep.subr.mxu0 %v41
    %71 = vmatpush1.msra.mxu0 %v40
    %72 = vmatprep.subr.mxu0 %v37
    %73 = vmatpush1.msra.mxu0 %v36
    %74 = vmatprep.subr.mxu0 %v33
    %75 = vmatpush1.msra.mxu0 %v32
    %76 = vmatprep.subr.mxu0 %v29
    %77 = vmatpush1.msra.mxu0 %v28
    %78 = vmatprep.subr.mxu0 %v25
    %79 = vmatpush1.msra.mxu0 %v24
    %80 = vmatprep.subr.mxu0 %v21
    %81 = vmatpush1.msra.mxu0 %v20
    %82 = vmatprep.subr.mxu0 %v17
    %83 = vmatpush1.msra.mxu0 %v16
    %84 = vmatprep.subr.mxu0 0.0
    %85 = vmatpush2.msra.mxu0 0.0
    %86 = vmatprep.subr.mxu0 0.0
    %87 = vmatpush2.msra.mxu0 0.0
    %88 = vmatprep.subr.mxu0 0.0
    %89 = vmatpush2.msra.mxu0 0.0
    %90 = vmatprep.subr.mxu0 0.0
    %91 = vmatpush2.msra.mxu0 0.0
    %92 = vmatprep.subr.mxu0 0.0
    %93 = vmatpush2.msra.mxu0 0.0
    %94 = vmatprep.subr.mxu0 0.0
    %95 = vmatpush2.msra.mxu0 0.0
    %96 = vmatprep.subr.mxu0 0.0
    %97 = vmatpush2.msra.mxu0 0.0
    %98 = vmatprep.subr.mxu0 0.0
    %99 = vmatpush2.msra.mxu0 0.0
    %100 = vmatprep.subr.mxu0 0.0
    %101 = vmatpush2.msra.mxu0 0.0
    %102 = vmatprep.subr.mxu0 0.0
    %103 = vmatpush2.msra.mxu0 0.0
    %104 = vmatprep.subr.mxu0 0.0
    %105 = vmatpush2.msra.mxu0 0.0
    %106 = vmatprep.subr.mxu0 0.0
    %107 = vmatpush2.msra.mxu0 0.0
    %108 = vmatprep.subr.mxu0 0.0
    %109 = vmatpush2.msra.mxu0 0.0
    %110 = vmatprep.subr.mxu0 0.0
    %111 = vmatpush2.msra.mxu0 0.0
    %112 = vmatprep.subr.mxu0 0.0
    %113 = vmatpush2.msra.mxu0 0.0
    %114 = vmatprep.subr.mxu0 0.0
    %115 = vmatpush2.msra.mxu0 0.0
    %116 = vmatprep.mubr.f32.mxu0 0.0
    %117 = vmatmul.mubr.f32.gmra.mxu0 %v50
    %v118 = vpop.f32.mrf.mxu0
    %v119 = vadd.f32 0.0, %v118
    %v120 = vpop.f32.mrf.mxu0
    %v121 = vadd.f32 0.0, %v120
    %122 = vdwg.mxu0
    %123 = vmatprep.subr.mxu0 0.0
    %124 = vmatpush1.msra.mxu0 0.0
    %125 = vmatprep.subr.mxu0 0.0
    %126 = vmatpush1.msra.mxu0 0.0
    %127 = vmatprep.subr.mxu0 0.0
    %128 = vmatpush1.msra.mxu0 0.0
    %129 = vmatprep.subr.mxu0 0.0
    %130 = vmatpush1.msra.mxu0 0.0
    %131 = vmatprep.subr.mxu0 0.0
    %132 = vmatpush1.msra.mxu0 0.0
    %133 = vmatprep.subr.mxu0 0.0
    %134 = vmatpush1.msra.mxu0 0.0
    %135 = vmatprep.subr.mxu0 0.0
    %136 = vmatpush1.msra.mxu0 0.0
    %137 = vmatprep.subr.mxu0 0.0
    %138 = vmatpush1.msra.mxu0 0.0
    %139 = vmatprep.subr.mxu0 %v47
    %140 = vmatpush1.msra.mxu0 %v46
    %141 = vmatprep.subr.mxu0 %v43
    %142 = vmatpush1.msra.mxu0 %v42
    %143 = vmatprep.subr.mxu0 %v39
    %144 = vmatpush1.msra.mxu0 %v38
    %145 = vmatprep.subr.mxu0 %v35
    %146 = vmatpush1.msra.mxu0 %v34
    %147 = vmatprep.subr.mxu0 %v31
    %148 = vmatpush1.msra.mxu0 %v30
    %149 = vmatprep.subr.mxu0 %v27
    %150 = vmatpush1.msra.mxu0 %v26
    %151 = vmatprep.subr.mxu0 %v23
    %152 = vmatpush1.msra.mxu0 %v22
    %153 = vmatprep.subr.mxu0 %v19
    %154 = vmatpush1.msra.mxu0 %v18
    %155 = vmatprep.subr.mxu0 0.0
    %156 = vmatpush2.msra.mxu0 0.0
    %157 = vmatprep.subr.mxu0 0.0
    %158 = vmatpush2.msra.mxu0 0.0
    %159 = vmatprep.subr.mxu0 0.0
    %160 = vmatpush2.msra.mxu0 0.0
    %161 = vmatprep.subr.mxu0 0.0
    %162 = vmatpush2.msra.mxu0 0.0
    %163 = vmatprep.subr.mxu0 0.0
    %164 = vmatpush2.msra.mxu0 0.0
    %165 = vmatprep.subr.mxu0 0.0
    %166 = vmatpush2.msra.mxu0 0.0
    %167 = vmatprep.subr.mxu0 0.0
    %168 = vmatpush2.msra.mxu0 0.0
    %169 = vmatprep.subr.mxu0 0.0
    %170 = vmatpush2.msra.mxu0 0.0
    %171 = vmatprep.subr.mxu0 0.0
    %172 = vmatpush2.msra.mxu0 0.0
    %173 = vmatprep.subr.mxu0 0.0
    %174 = vmatpush2.msra.mxu0 0.0
    %175 = vmatprep.subr.mxu0 0.0
    %176 = vmatpush2.msra.mxu0 0.0
    %177 = vmatprep.subr.mxu0 0.0
    %178 = vmatpush2.msra.mxu0 0.0
    %179 = vmatprep.subr.mxu0 0.0
    %180 = vmatpush2.msra.mxu0 0.0
    %181 = vmatprep.subr.mxu0 0.0
    %182 = vmatpush2.msra.mxu0 0.0
    %183 = vmatprep.subr.mxu0 0.0
    %184 = vmatpush2.msra.mxu0 0.0
    %185 = vmatprep.subr.mxu0 0.0
    %186 = vmatpush2.msra.mxu0 0.0
    %187 = vmatprep.mubr.f32.mxu0 0.0
    %188 = vmatmul.mubr.f32.gmra.mxu0 %v50
    %v189 = vpop.f32.mrf.mxu0
    %v190 = vadd.f32 0.0, %v189
    %v191 = vpop.f32.mrf.mxu0
    %v192 = vadd.f32 0.0, %v191
    %193 = vdwg.mxu0
    %v194 = vmax.f32 %v119, %v121
    %v195 = vmax.f32 %v190, %v192
    %v196 = vmax.f32 %v194, %v195
    %197 = vrot.lane.b32.xlu0 %v196, 64
    %v198 = vpop.permute.xlu0 %197
    %v199 = vmax.f32 %v196, %v198
    %200 = vrot.lane.b32.xlu0 %v199, 32
    %v201 = vpop.permute.xlu0 %200
    %v202 = vmax.f32 %v199, %v201
    %v203 = vld [vmem:[%s2] sm:$0x1]
    %v205 = vlaneseq
    %v206 = vshrl.u32 %v205, 7
    %v207 = vsub.s32 0, %v206
    %v208 = vrot.slane %v203, %v207
    %v210 = vadd.f32 %v202, %v208
    %v211 = vmax.f32 %v210, 0.0
    %vm212 = vcmask 261120
    %213 = vst.msk [vmem:[#allocation2] sm:$0xff] %vm212, %v211
    // Predicated region
    $region14: #{cnn_forward.1} parent=1 // pred_check
      _
    $region15: #{cnn_forward.1} parent=1 // pred_check_branch
      %215 = sbr.rel (0) target = $region17
    $region16: #{cnn_forward.1} parent=1 // pred_region
      %s217 = ssub.s32 128, 32
      %218 = vsyncadd [#allocation3], %s217
      %s219 = sshll.u32 [#allocation2], 4
      %s220 = int_to_ptr.vmem [resolvable:$true] %s219
      %225 = dma.vmem_to_hbm [thread:$0]  %s220, 32, %s3, [#allocation3], 32, 32, 2
    $region17: #{cnn_forward.1} parent=1 // pred_fallthru
      _
    // Predicated region
    $region18: #{cnn_forward.1} parent=1 // pred_check
      _
    $region19: #{cnn_forward.1} parent=1 // pred_check_branch
      %227 = sbr.rel (0) target = $region21
    $region20: #{cnn_forward.1} parent=1 // pred_region
      %228 = dma.done [#allocation3], 128
    $region21: #{cnn_forward.1} parent=1 // pred_fallthru
      _
    %229 = vsyncpa [#allocation3], 1

</llo_original>
